<compile_context>
chip_gen: v7x
topology: tpu7x:2x2x1
jax: 0.10.0
libtpu: 0.0.40
codegen_flags: <defaults>
</compile_context>

<pallas_src>
import jax
import jax.numpy as jnp
from jax.experimental import pallas as pl
from jax.experimental.pallas import tpu as pltpu

STATE_DIM = 2
INPUT_SIZE = STATE_DIM + 1               # [x, y, t]
HIDDEN = [128, 64, 128, 64, 128, 64]     # hidden_size from the reference module
OUTPUT_SIZE = STATE_DIM
LANE = 128                               # hidden widths padded to this (lane-dense)
MAX_ROW_TILE = 512                       # batch rows per grid step (VMEM is tiny here)
MIN_SPLIT_B = 16                         # below this a 2-way TC split is pointless


def _silu(x):
    # SiLU(x) = x * sigmoid(x) = x * 1/(1 + exp(-x)).
    # exp -> EUP; approx reciprocal -> EUP vrcp (VALU divide sequence avoided).
    return x * pl.reciprocal(1.0 + jnp.exp(-x), approx=True)


def _odefunc_kernel(t_ref, y_ref,
                    w0, b0, w1, b1, w2, b2, w3, b3, w4, b4, w5, b5, w6t, b6,
                    out_ref):
    """out = phys(y) + MLP([y, t]) for one (tm, 2) block of the batch.

    t_ref:  (1,1) scalar in SMEM.
    y_ref:  (tm, 2) state tile in VMEM.
    w0/b0:  (3,128)/(1,128) f32  -- K=3 first layer, done on the VPU.
    w1..w5: (128,128) bf16, b1..b5: (1,128) f32 -- MXU layers.
    w6t:    (8,128) f32, rows 0/1 are the two output columns of the final Linear
            (lane-padded 64->128); final projection done on VPU+XLU, not MXU.
    b6:     (1,2) f32.
    """
    t = t_ref[0, 0]
    y = y_ref[...]
    x0 = y[:, 0:1]                       # (tm, 1)
    y1 = y[:, 1:2]                       # (tm, 1)

    # --- known physics on the VPU ---
    # dx/dt = -2x - y ; dy/dt = -x - 2y
    dx = -2.0 * x0 - y1
    dy = -x0 - 2.0 * y1

    # --- layer 0: cat([y, t]) @ W0 + b0  (K=3 -> VPU broadcast mul-adds, f32) ---
    h = x0 * w0[0:1, :] + y1 * w0[1:2, :] + t * w0[2:3, :] + b0[...]
    h = _silu(h)

    # --- hidden layers 1..5: bf16 MXU matmuls, f32 accumulate / bias / SiLU ---
    for w, b in ((w1, b1), (w2, b2), (w3, b3), (w4, b4), (w5, b5)):
        acc = jnp.dot(h.astype(jnp.bfloat16), w[...],
                      preferred_element_type=jnp.float32)
        h = _silu(acc + b[...])

    # --- Dropout(p=0) is identity; final Linear 128->2 on VPU (mul) + XLU (reduce) ---
    c0 = jnp.sum(h * w6t[0:1, :], axis=-1, keepdims=True)   # (tm, 1)
    c1 = jnp.sum(h * w6t[1:2, :], axis=-1, keepdims=True)   # (tm, 1)

    lane = jax.lax.broadcasted_iota(jnp.int32, (y.shape[0], STATE_DIM), 1)
    out = jnp.where(lane == 0, dx + c0, dy + c1) + b6[...]   # (tm, 2)
    out_ref[...] = out.astype(out_ref.dtype)


def init_params(key):
    """Deterministic PyTorch-style Linear init: U(-1/sqrt(fan_in), 1/sqrt(fan_in))."""
    dims = [INPUT_SIZE] + HIDDEN + [OUTPUT_SIZE]
    weights, biases = [], []
    for i in range(len(dims) - 1):
        fan_in, fan_out = dims[i], dims[i + 1]
        key, kw, kb = jax.random.split(key, 3)
        bound = 1.0 / jnp.sqrt(jnp.float32(fan_in))
        # stored already transposed: (in, out)
        w = jax.random.uniform(kw, (fan_in, fan_out), jnp.float32, -bound, bound)
        b = jax.random.uniform(kb, (1, fan_out), jnp.float32, -bound, bound)
        weights.append(w)
        biases.append(b)
    return weights, biases


def _pad_to(a, rows, cols):
    pr, pc = rows - a.shape[0], cols - a.shape[1]
    if pr == 0 and pc == 0:
        return a
    return jnp.pad(a, ((0, pr), (0, pc)))


def _round_up(n, m):
    return ((n + m - 1) // m) * m


@jax.jit
def ode_func_forward(t, y, weights, biases):
    B = y.shape[0]

    # Zero-pad hidden widths to LANE (exact: silu(0)=0, zero rows/cols add 0).
    dims = [INPUT_SIZE] + HIDDEN + [OUTPUT_SIZE]
    pdims = [dims[0]] + [LANE] * len(HIDDEN) + [OUTPUT_SIZE]

    flat = []
    # layer 0: f32, done on VPU
    flat.append(_pad_to(weights[0], pdims[0], pdims[1]))
    flat.append(_pad_to(biases[0], 1, pdims[1]))
    # layers 1..5: bf16 weights (MXU), f32 biases
    for i in range(1, 6):
        flat.append(_pad_to(weights[i], pdims[i], pdims[i + 1]).astype(jnp.bfloat16))
        flat.append(_pad_to(biases[i], 1, pdims[i + 1]))
    # final layer: transposed to (out, in) rows, lane-padded, f32 (VPU/XLU path)
    flat.append(_pad_to(weights[6].T, 8, LANE))      # (8, 128), rows 0..1 used
    flat.append(biases[6])                           # (1, 2)

    # Batch tiling: large tiles for MXU duty cycle (v5e/v6e), but keep >=2
    # "parallel" grid steps for mid-size batches so v7x's 2 TCs both get work.
    if B <= MIN_SPLIT_B:
        tm = max(8, _round_up(B, 8))
        bp = tm
    elif B <= 2 * MAX_ROW_TILE:
        tm = _round_up((B + 1) // 2, 8)
        bp = 2 * tm
    else:
        tm = MAX_ROW_TILE
        bp = _round_up(B, tm)
    y_p = jnp.pad(y.astype(jnp.float32), ((0, bp - B), (0, 0)))
    t_arr = jnp.reshape(jnp.asarray(t, jnp.float32), (1, 1))

    # Weights: full-array blocks with constant index_map -> VMEM-resident
    # across all grid iterations (no per-step re-DMA).
    def const_spec(arr):
        return pl.BlockSpec(arr.shape, lambda i: (0, 0))

    in_specs = (
        [pl.BlockSpec(memory_space=pltpu.MemorySpace.SMEM)]       # t scalar
        + [pl.BlockSpec((tm, STATE_DIM), lambda i: (i, 0))]       # y row tile
        + [const_spec(a) for a in flat]                           # weights/biases
    )
    out_spec = pl.BlockSpec((tm, OUTPUT_SIZE), lambda i: (i, 0))

    flops = (2 * bp * 5 * LANE * LANE          # MXU layers
             + 2 * bp * INPUT_SIZE * LANE      # layer 0 (VPU)
             + 2 * bp * LANE * OUTPUT_SIZE     # final projection (VPU/XLU)
             + 6 * bp)                         # physics
    transcendentals = 6 * bp * LANE
    bytes_accessed = (sum(int(a.size) * a.dtype.itemsize for a in flat)
                      + 4 * int(y_p.size) + 4 * bp * OUTPUT_SIZE)

    out = pl.pallas_call(
        _odefunc_kernel,
        out_shape=jax.ShapeDtypeStruct((bp, OUTPUT_SIZE), jnp.float32),
        grid=(bp // tm,),
        in_specs=in_specs,
        out_specs=out_spec,
        compiler_params=pltpu.CompilerParams(dimension_semantics=("parallel",)),
        cost_estimate=pl.CostEstimate(flops=flops,
                                      transcendentals=transcendentals,
                                      bytes_accessed=bytes_accessed),
    )(t_arr, y_p, *flat)
    return out[:B]
    # TODO(synk): when used inside an ODE solver, fuse the RK stages / time loop
    # into one pallas_call (inner lax.fori_loop or extra "arbitrary" grid axis)
    # so the launch + weight-DMA cost amortizes over the whole trajectory.


def ode_func_reference(t, y, weights, biases):
    """Pure-JAX f32 reference of the same forward for validation."""
    x, yv = y[..., 0], y[..., 1]
    phys = jnp.stack([-2.0 * x - yv, -x - 2.0 * yv], axis=-1)
    tb = jnp.full((y.shape[0], 1), t, dtype=jnp.float32)
    h = jnp.concatenate([y, tb], axis=-1)
    for i in range(len(weights) - 1):
        h = h @ weights[i] + biases[i]
        h = h * jax.nn.sigmoid(h)
    corr = h @ weights[-1] + biases[-1]
    return phys + corr


if __name__ == "__main__":
    key = jax.random.PRNGKey(0)
    key, ky = jax.random.split(key)
    B = 8
    y = jax.random.normal(ky, (B, STATE_DIM), jnp.float32)
    t = jnp.float32(0.5)

    weights, biases = init_params(key)

    out = ode_func_forward(t, y, weights, biases)
    out = jax.block_until_ready(out)

    ref = ode_func_reference(t, y, weights, biases)
    assert out.shape == (B, STATE_DIM)
    # bf16 matmul operands + approx EUP reciprocal perturb numerics slightly.
    assert jnp.allclose(out, ref, atol=1e-2, rtol=1e-2), (out, ref)

    print("KERNEL_OK")
</pallas_src>

<mosaic_0001>
module attributes {stable_mosaic.version = 11 : i64} {
  func.func @_odefunc_kernel(%arg0: i32, %arg1: memref<1x1xf32, #tpu.memory_space<smem>>, %arg2: memref<8x2xf32, #tpu.memory_space<vmem>>, %arg3: memref<3x128xf32, #tpu.memory_space<vmem>>, %arg4: memref<1x128xf32, #tpu.memory_space<vmem>>, %arg5: memref<128x128xbf16, #tpu.memory_space<vmem>>, %arg6: memref<1x128xf32, #tpu.memory_space<vmem>>, %arg7: memref<128x128xbf16, #tpu.memory_space<vmem>>, %arg8: memref<1x128xf32, #tpu.memory_space<vmem>>, %arg9: memref<128x128xbf16, #tpu.memory_space<vmem>>, %arg10: memref<1x128xf32, #tpu.memory_space<vmem>>, %arg11: memref<128x128xbf16, #tpu.memory_space<vmem>>, %arg12: memref<1x128xf32, #tpu.memory_space<vmem>>, %arg13: memref<128x128xbf16, #tpu.memory_space<vmem>>, %arg14: memref<1x128xf32, #tpu.memory_space<vmem>>, %arg15: memref<8x128xf32, #tpu.memory_space<vmem>>, %arg16: memref<1x2xf32, #tpu.memory_space<vmem>>, %arg17: memref<8x2xf32, #tpu.memory_space<vmem>>) attributes {dimension_semantics = [#tpu.dimension_semantics<parallel>], iteration_bounds = array<i64: 1>, scalar_prefetch = 0 : i64, scratch_operands = 0 : i64, tpu.core_type = #tpu.core_type<tc>, window_params = [{transform_indices = @transform_0, window_bounds = array<i64: 1, 1>}, {transform_indices = @transform_1, window_bounds = array<i64: 8, 2>}, {pipeline_mode = #tpu.pipeline_mode<synchronous>, transform_indices = @transform_2, window_bounds = array<i64: 3, 128>}, {pipeline_mode = #tpu.pipeline_mode<synchronous>, transform_indices = @transform_3, window_bounds = array<i64: 1, 128>}, {pipeline_mode = #tpu.pipeline_mode<synchronous>, transform_indices = @transform_4, window_bounds = array<i64: 128, 128>}, {pipeline_mode = #tpu.pipeline_mode<synchronous>, transform_indices = @transform_5, window_bounds = array<i64: 1, 128>}, {pipeline_mode = #tpu.pipeline_mode<synchronous>, transform_indices = @transform_6, window_bounds = array<i64: 128, 128>}, {pipeline_mode = #tpu.pipeline_mode<synchronous>, transform_indices = @transform_7, window_bounds = array<i64: 1, 128>}, {pipeline_mode = #tpu.pipeline_mode<synchronous>, transform_indices = @transform_8, window_bounds = array<i64: 128, 128>}, {pipeline_mode = #tpu.pipeline_mode<synchronous>, transform_indices = @transform_9, window_bounds = array<i64: 1, 128>}, {pipeline_mode = #tpu.pipeline_mode<synchronous>, transform_indices = @transform_10, window_bounds = array<i64: 128, 128>}, {pipeline_mode = #tpu.pipeline_mode<synchronous>, transform_indices = @transform_11, window_bounds = array<i64: 1, 128>}, {pipeline_mode = #tpu.pipeline_mode<synchronous>, transform_indices = @transform_12, window_bounds = array<i64: 128, 128>}, {pipeline_mode = #tpu.pipeline_mode<synchronous>, transform_indices = @transform_13, window_bounds = array<i64: 1, 128>}, {pipeline_mode = #tpu.pipeline_mode<synchronous>, transform_indices = @transform_14, window_bounds = array<i64: 8, 128>}, {pipeline_mode = #tpu.pipeline_mode<synchronous>, transform_indices = @transform_15, window_bounds = array<i64: 1, 2>}, {transform_indices = @transform_16, window_bounds = array<i64: 8, 2>}]} {
    %c0 = arith.constant 0 : index
    %c0_0 = arith.constant 0 : index
    %0 = memref.load %arg1[%c0, %c0_0] : memref<1x1xf32, #tpu.memory_space<smem>>
    %c0_1 = arith.constant 0 : index
    %c0_2 = arith.constant 0 : index
    %1 = vector.load %arg2[%c0_1, %c0_2] : memref<8x2xf32, #tpu.memory_space<vmem>>, vector<8x2xf32>
    %2 = vector.extract_strided_slice %1 {offsets = [0, 0], sizes = [8, 1], strides = [1, 1]} : vector<8x2xf32> to vector<8x1xf32>
    %3 = vector.extract_strided_slice %1 {offsets = [0, 1], sizes = [8, 1], strides = [1, 1]} : vector<8x2xf32> to vector<8x1xf32>
    %cst = arith.constant -2.000000e+00 : f32
    %4 = vector.broadcast %cst : f32 to vector<8x1xf32>
    %5 = arith.mulf %4, %2 : vector<8x1xf32>
    %6 = arith.subf %5, %3 : vector<8x1xf32>
    %cst_3 = arith.constant 0.000000e+00 : f32
    %7 = vector.broadcast %cst_3 : f32 to vector<8x1xf32>
    %8 = arith.subf %7, %2 : vector<8x1xf32>
    %cst_4 = arith.constant 2.000000e+00 : f32
    %9 = vector.broadcast %cst_4 : f32 to vector<8x1xf32>
    %10 = arith.mulf %9, %3 : vector<8x1xf32>
    %11 = arith.subf %8, %10 : vector<8x1xf32>
    %c0_5 = arith.constant 0 : index
    %c0_6 = arith.constant 0 : index
    %12 = vector.load %arg3[%c0_5, %c0_6] : memref<3x128xf32, #tpu.memory_space<vmem>>, vector<1x128xf32>
    %13 = vector.broadcast %2 : vector<8x1xf32> to vector<8x128xf32>
    %14 = vector.broadcast %12 : vector<1x128xf32> to vector<8x128xf32>
    %15 = arith.mulf %13, %14 : vector<8x128xf32>
    %c1 = arith.constant 1 : index
    %c0_7 = arith.constant 0 : index
    %16 = vector.load %arg3[%c1, %c0_7] : memref<3x128xf32, #tpu.memory_space<vmem>>, vector<1x128xf32>
    %17 = vector.broadcast %3 : vector<8x1xf32> to vector<8x128xf32>
    %18 = vector.broadcast %16 : vector<1x128xf32> to vector<8x128xf32>
    %19 = arith.mulf %17, %18 : vector<8x128xf32>
    %20 = arith.addf %15, %19 : vector<8x128xf32>
    %c2 = arith.constant 2 : index
    %c0_8 = arith.constant 0 : index
    %21 = vector.load %arg3[%c2, %c0_8] : memref<3x128xf32, #tpu.memory_space<vmem>>, vector<1x128xf32>
    %22 = vector.broadcast %0 : f32 to vector<1x128xf32>
    %23 = arith.mulf %22, %21 : vector<1x128xf32>
    %24 = vector.broadcast %23 : vector<1x128xf32> to vector<8x128xf32>
    %25 = arith.addf %20, %24 : vector<8x128xf32>
    %c0_9 = arith.constant 0 : index
    %c0_10 = arith.constant 0 : index
    %26 = vector.load %arg4[%c0_9, %c0_10] : memref<1x128xf32, #tpu.memory_space<vmem>>, vector<1x128xf32>
    %27 = vector.broadcast %26 : vector<1x128xf32> to vector<8x128xf32>
    %28 = arith.addf %25, %27 : vector<8x128xf32>
    %cst_11 = arith.constant 0.000000e+00 : f32
    %29 = vector.broadcast %cst_11 : f32 to vector<8x128xf32>
    %30 = arith.subf %29, %28 : vector<8x128xf32>
    %31 = math.exp %30 : vector<8x128xf32>
    %cst_12 = arith.constant 1.000000e+00 : f32
    %32 = vector.broadcast %cst_12 : f32 to vector<8x128xf32>
    %33 = arith.addf %32, %31 : vector<8x128xf32>
    %34 = tpu.reciprocal %33 {approx = true} : vector<8x128xf32> -> vector<8x128xf32>
    %35 = arith.mulf %28, %34 : vector<8x128xf32>
    %36 = arith.truncf %35 : vector<8x128xf32> to vector<8x128xbf16>
    %c0_13 = arith.constant 0 : index
    %c0_14 = arith.constant 0 : index
    %37 = vector.load %arg5[%c0_13, %c0_14] : memref<128x128xbf16, #tpu.memory_space<vmem>>, vector<128x128xbf16>
    %cst_15 = arith.constant dense<0.000000e+00> : vector<8x128xf32>
    %38 = tpu.matmul %36, %37, %cst_15 {dimension_numbers = #tpu.dot_dimension_numbers<[1], [0], [0], [1], [0, 0, 1, 1], [], []>} : vector<8x128xbf16>, vector<128x128xbf16>, vector<8x128xf32> -> vector<8x128xf32>
    %c0_16 = arith.constant 0 : index
    %c0_17 = arith.constant 0 : index
    %39 = vector.load %arg6[%c0_16, %c0_17] : memref<1x128xf32, #tpu.memory_space<vmem>>, vector<1x128xf32>
    %40 = vector.broadcast %39 : vector<1x128xf32> to vector<8x128xf32>
    %41 = arith.addf %38, %40 : vector<8x128xf32>
    %cst_18 = arith.constant 0.000000e+00 : f32
    %42 = vector.broadcast %cst_18 : f32 to vector<8x128xf32>
    %43 = arith.subf %42, %41 : vector<8x128xf32>
    %44 = math.exp %43 : vector<8x128xf32>
    %cst_19 = arith.constant 1.000000e+00 : f32
    %45 = vector.broadcast %cst_19 : f32 to vector<8x128xf32>
    %46 = arith.addf %45, %44 : vector<8x128xf32>
    %47 = tpu.reciprocal %46 {approx = true} : vector<8x128xf32> -> vector<8x128xf32>
    %48 = arith.mulf %41, %47 : vector<8x128xf32>
    %49 = arith.truncf %48 : vector<8x128xf32> to vector<8x128xbf16>
    %c0_20 = arith.constant 0 : index
    %c0_21 = arith.constant 0 : index
    %50 = vector.load %arg7[%c0_20, %c0_21] : memref<128x128xbf16, #tpu.memory_space<vmem>>, vector<128x128xbf16>
    %cst_22 = arith.constant dense<0.000000e+00> : vector<8x128xf32>
    %51 = tpu.matmul %49, %50, %cst_22 {dimension_numbers = #tpu.dot_dimension_numbers<[1], [0], [0], [1], [0, 0, 1, 1], [], []>} : vector<8x128xbf16>, vector<128x128xbf16>, vector<8x128xf32> -> vector<8x128xf32>
    %c0_23 = arith.constant 0 : index
    %c0_24 = arith.constant 0 : index
    %52 = vector.load %arg8[%c0_23, %c0_24] : memref<1x128xf32, #tpu.memory_space<vmem>>, vector<1x128xf32>
    %53 = vector.broadcast %52 : vector<1x128xf32> to vector<8x128xf32>
    %54 = arith.addf %51, %53 : vector<8x128xf32>
    %cst_25 = arith.constant 0.000000e+00 : f32
    %55 = vector.broadcast %cst_25 : f32 to vector<8x128xf32>
    %56 = arith.subf %55, %54 : vector<8x128xf32>
    %57 = math.exp %56 : vector<8x128xf32>
    %cst_26 = arith.constant 1.000000e+00 : f32
    %58 = vector.broadcast %cst_26 : f32 to vector<8x128xf32>
    %59 = arith.addf %58, %57 : vector<8x128xf32>
    %60 = tpu.reciprocal %59 {approx = true} : vector<8x128xf32> -> vector<8x128xf32>
    %61 = arith.mulf %54, %60 : vector<8x128xf32>
    %62 = arith.truncf %61 : vector<8x128xf32> to vector<8x128xbf16>
    %c0_27 = arith.constant 0 : index
    %c0_28 = arith.constant 0 : index
    %63 = vector.load %arg9[%c0_27, %c0_28] : memref<128x128xbf16, #tpu.memory_space<vmem>>, vector<128x128xbf16>
    %cst_29 = arith.constant dense<0.000000e+00> : vector<8x128xf32>
    %64 = tpu.matmul %62, %63, %cst_29 {dimension_numbers = #tpu.dot_dimension_numbers<[1], [0], [0], [1], [0, 0, 1, 1], [], []>} : vector<8x128xbf16>, vector<128x128xbf16>, vector<8x128xf32> -> vector<8x128xf32>
    %c0_30 = arith.constant 0 : index
    %c0_31 = arith.constant 0 : index
    %65 = vector.load %arg10[%c0_30, %c0_31] : memref<1x128xf32, #tpu.memory_space<vmem>>, vector<1x128xf32>
    %66 = vector.broadcast %65 : vector<1x128xf32> to vector<8x128xf32>
    %67 = arith.addf %64, %66 : vector<8x128xf32>
    %cst_32 = arith.constant 0.000000e+00 : f32
    %68 = vector.broadcast %cst_32 : f32 to vector<8x128xf32>
    %69 = arith.subf %68, %67 : vector<8x128xf32>
    %70 = math.exp %69 : vector<8x128xf32>
    %cst_33 = arith.constant 1.000000e+00 : f32
    %71 = vector.broadcast %cst_33 : f32 to vector<8x128xf32>
    %72 = arith.addf %71, %70 : vector<8x128xf32>
    %73 = tpu.reciprocal %72 {approx = true} : vector<8x128xf32> -> vector<8x128xf32>
    %74 = arith.mulf %67, %73 : vector<8x128xf32>
    %75 = arith.truncf %74 : vector<8x128xf32> to vector<8x128xbf16>
    %c0_34 = arith.constant 0 : index
    %c0_35 = arith.constant 0 : index
    %76 = vector.load %arg11[%c0_34, %c0_35] : memref<128x128xbf16, #tpu.memory_space<vmem>>, vector<128x128xbf16>
    %cst_36 = arith.constant dense<0.000000e+00> : vector<8x128xf32>
    %77 = tpu.matmul %75, %76, %cst_36 {dimension_numbers = #tpu.dot_dimension_numbers<[1], [0], [0], [1], [0, 0, 1, 1], [], []>} : vector<8x128xbf16>, vector<128x128xbf16>, vector<8x128xf32> -> vector<8x128xf32>
    %c0_37 = arith.constant 0 : index
    %c0_38 = arith.constant 0 : index
    %78 = vector.load %arg12[%c0_37, %c0_38] : memref<1x128xf32, #tpu.memory_space<vmem>>, vector<1x128xf32>
    %79 = vector.broadcast %78 : vector<1x128xf32> to vector<8x128xf32>
    %80 = arith.addf %77, %79 : vector<8x128xf32>
    %cst_39 = arith.constant 0.000000e+00 : f32
    %81 = vector.broadcast %cst_39 : f32 to vector<8x128xf32>
    %82 = arith.subf %81, %80 : vector<8x128xf32>
    %83 = math.exp %82 : vector<8x128xf32>
    %cst_40 = arith.constant 1.000000e+00 : f32
    %84 = vector.broadcast %cst_40 : f32 to vector<8x128xf32>
    %85 = arith.addf %84, %83 : vector<8x128xf32>
    %86 = tpu.reciprocal %85 {approx = true} : vector<8x128xf32> -> vector<8x128xf32>
    %87 = arith.mulf %80, %86 : vector<8x128xf32>
    %88 = arith.truncf %87 : vector<8x128xf32> to vector<8x128xbf16>
    %c0_41 = arith.constant 0 : index
    %c0_42 = arith.constant 0 : index
    %89 = vector.load %arg13[%c0_41, %c0_42] : memref<128x128xbf16, #tpu.memory_space<vmem>>, vector<128x128xbf16>
    %cst_43 = arith.constant dense<0.000000e+00> : vector<8x128xf32>
    %90 = tpu.matmul %88, %89, %cst_43 {dimension_numbers = #tpu.dot_dimension_numbers<[1], [0], [0], [1], [0, 0, 1, 1], [], []>} : vector<8x128xbf16>, vector<128x128xbf16>, vector<8x128xf32> -> vector<8x128xf32>
    %c0_44 = arith.constant 0 : index
    %c0_45 = arith.constant 0 : index
    %91 = vector.load %arg14[%c0_44, %c0_45] : memref<1x128xf32, #tpu.memory_space<vmem>>, vector<1x128xf32>
    %92 = vector.broadcast %91 : vector<1x128xf32> to vector<8x128xf32>
    %93 = arith.addf %90, %92 : vector<8x128xf32>
    %cst_46 = arith.constant 0.000000e+00 : f32
    %94 = vector.broadcast %cst_46 : f32 to vector<8x128xf32>
    %95 = arith.subf %94, %93 : vector<8x128xf32>
    %96 = math.exp %95 : vector<8x128xf32>
    %cst_47 = arith.constant 1.000000e+00 : f32
    %97 = vector.broadcast %cst_47 : f32 to vector<8x128xf32>
    %98 = arith.addf %97, %96 : vector<8x128xf32>
    %99 = tpu.reciprocal %98 {approx = true} : vector<8x128xf32> -> vector<8x128xf32>
    %100 = arith.mulf %93, %99 : vector<8x128xf32>
    %c0_48 = arith.constant 0 : index
    %c0_49 = arith.constant 0 : index
    %101 = vector.load %arg15[%c0_48, %c0_49] : memref<8x128xf32, #tpu.memory_space<vmem>>, vector<1x128xf32>
    %102 = vector.broadcast %101 : vector<1x128xf32> to vector<8x128xf32>
    %103 = arith.mulf %100, %102 : vector<8x128xf32>
    %cst_50 = arith.constant dense<0.000000e+00> : vector<8xf32>
    %104 = vector.multi_reduction <add>, %103, %cst_50 [1] : vector<8x128xf32> to vector<8xf32>
    %105 = vector.shape_cast %104 : vector<8xf32> to vector<8x1xf32>
    %c1_51 = arith.constant 1 : index
    %c0_52 = arith.constant 0 : index
    %106 = vector.load %arg15[%c1_51, %c0_52] : memref<8x128xf32, #tpu.memory_space<vmem>>, vector<1x128xf32>
    %107 = vector.broadcast %106 : vector<1x128xf32> to vector<8x128xf32>
    %108 = arith.mulf %100, %107 : vector<8x128xf32>
    %cst_53 = arith.constant dense<0.000000e+00> : vector<8xf32>
    %109 = vector.multi_reduction <add>, %108, %cst_53 [1] : vector<8x128xf32> to vector<8xf32>
    %110 = vector.shape_cast %109 : vector<8xf32> to vector<8x1xf32>
    %111 = tpu.iota {dimensions = array<i32: 1>} : vector<8x2xi32>
    %c0_i32 = arith.constant 0 : i32
    %112 = vector.broadcast %c0_i32 : i32 to vector<8x2xi32>
    %113 = arith.cmpi eq, %111, %112 : vector<8x2xi32>
    %114 = arith.addf %6, %105 : vector<8x1xf32>
    %115 = arith.addf %11, %110 : vector<8x1xf32>
    %116 = vector.shape_cast %114 : vector<8x1xf32> to vector<8x1xf32>
    %117 = vector.broadcast %116 : vector<8x1xf32> to vector<8x2xf32>
    %118 = vector.shape_cast %115 : vector<8x1xf32> to vector<8x1xf32>
    %119 = vector.broadcast %118 : vector<8x1xf32> to vector<8x2xf32>
    %120 = arith.select %113, %117, %119 : vector<8x2xi1>, vector<8x2xf32>
    %c0_54 = arith.constant 0 : index
    %c0_55 = arith.constant 0 : index
    %121 = vector.load %arg16[%c0_54, %c0_55] : memref<1x2xf32, #tpu.memory_space<vmem>>, vector<1x2xf32>
    %122 = vector.broadcast %121 : vector<1x2xf32> to vector<8x2xf32>
    %123 = arith.addf %120, %122 : vector<8x2xf32>
    %c0_56 = arith.constant 0 : index
    %c0_57 = arith.constant 0 : index
    %124 = vector.load %arg17[%c0_56, %c0_57] : memref<8x2xf32, #tpu.memory_space<vmem>>, vector<8x2xf32>
    tpu.vector_store %arg17[%c0_56, %c0_57], %123 {strides = array<i32>} : memref<8x2xf32, #tpu.memory_space<vmem>>, vector<8x2xf32>,
    return
  }
  func.func @transform_0(%arg0: i32) -> (i32, i32) {
    %c0_i32 = arith.constant 0 : i32
    %c0_i32_0 = arith.constant 0 : i32
    %c0_i32_1 = arith.constant 0 : i32
    return %c0_i32, %c0_i32_0 : i32, i32
  }
  func.func @transform_1(%arg0: i32) -> (i32, i32) {
    %c0_i32 = arith.constant 0 : i32
    %c0_i32_0 = arith.constant 0 : i32
    return %arg0, %c0_i32 : i32, i32
  }
  func.func @transform_2(%arg0: i32) -> (i32, i32) {
    %c0_i32 = arith.constant 0 : i32
    %c0_i32_0 = arith.constant 0 : i32
    %c0_i32_1 = arith.constant 0 : i32
    return %c0_i32, %c0_i32_0 : i32, i32
  }
  func.func @transform_3(%arg0: i32) -> (i32, i32) {
    %c0_i32 = arith.constant 0 : i32
    %c0_i32_0 = arith.constant 0 : i32
    %c0_i32_1 = arith.constant 0 : i32
    return %c0_i32, %c0_i32_0 : i32, i32
  }
  func.func @transform_4(%arg0: i32) -> (i32, i32) {
    %c0_i32 = arith.constant 0 : i32
    %c0_i32_0 = arith.constant 0 : i32
    %c0_i32_1 = arith.constant 0 : i32
    return %c0_i32, %c0_i32_0 : i32, i32
  }
  func.func @transform_5(%arg0: i32) -> (i32, i32) {
    %c0_i32 = arith.constant 0 : i32
    %c0_i32_0 = arith.constant 0 : i32
    %c0_i32_1 = arith.constant 0 : i32
    return %c0_i32, %c0_i32_0 : i32, i32
  }
  func.func @transform_6(%arg0: i32) -> (i32, i32) {
    %c0_i32 = arith.constant 0 : i32
    %c0_i32_0 = arith.constant 0 : i32
    %c0_i32_1 = arith.constant 0 : i32
    return %c0_i32, %c0_i32_0 : i32, i32
  }
  func.func @transform_7(%arg0: i32) -> (i32, i32) {
    %c0_i32 = arith.constant 0 : i32
    %c0_i32_0 = arith.constant 0 : i32
    %c0_i32_1 = arith.constant 0 : i32
    return %c0_i32, %c0_i32_0 : i32, i32
  }
  func.func @transform_8(%arg0: i32) -> (i32, i32) {
    %c0_i32 = arith.constant 0 : i32
    %c0_i32_0 = arith.constant 0 : i32
    %c0_i32_1 = arith.constant 0 : i32
    return %c0_i32, %c0_i32_0 : i32, i32
  }
  func.func @transform_9(%arg0: i32) -> (i32, i32) {
    %c0_i32 = arith.constant 0 : i32
    %c0_i32_0 = arith.constant 0 : i32
    %c0_i32_1 = arith.constant 0 : i32
    return %c0_i32, %c0_i32_0 : i32, i32
  }
  func.func @transform_10(%arg0: i32) -> (i32, i32) {
    %c0_i32 = arith.constant 0 : i32
    %c0_i32_0 = arith.constant 0 : i32
    %c0_i32_1 = arith.constant 0 : i32
    return %c0_i32, %c0_i32_0 : i32, i32
  }
  func.func @transform_11(%arg0: i32) -> (i32, i32) {
    %c0_i32 = arith.constant 0 : i32
    %c0_i32_0 = arith.constant 0 : i32
    %c0_i32_1 = arith.constant 0 : i32
    return %c0_i32, %c0_i32_0 : i32, i32
  }
  func.func @transform_12(%arg0: i32) -> (i32, i32) {
    %c0_i32 = arith.constant 0 : i32
    %c0_i32_0 = arith.constant 0 : i32
    %c0_i32_1 = arith.constant 0 : i32
    return %c0_i32, %c0_i32_0 : i32, i32
  }
  func.func @transform_13(%arg0: i32) -> (i32, i32) {
    %c0_i32 = arith.constant 0 : i32
    %c0_i32_0 = arith.constant 0 : i32
    %c0_i32_1 = arith.constant 0 : i32
    return %c0_i32, %c0_i32_0 : i32, i32
  }
  func.func @transform_14(%arg0: i32) -> (i32, i32) {
    %c0_i32 = arith.constant 0 : i32
    %c0_i32_0 = arith.constant 0 : i32
    %c0_i32_1 = arith.constant 0 : i32
    return %c0_i32, %c0_i32_0 : i32, i32
  }
  func.func @transform_15(%arg0: i32) -> (i32, i32) {
    %c0_i32 = arith.constant 0 : i32
    %c0_i32_0 = arith.constant 0 : i32
    %c0_i32_1 = arith.constant 0 : i32
    return %c0_i32, %c0_i32_0 : i32, i32
  }
  func.func @transform_16(%arg0: i32) -> (i32, i32) {
    %c0_i32 = arith.constant 0 : i32
    %c0_i32_0 = arith.constant 0 : i32
    return %arg0, %c0_i32 : i32, i32
  }
}

</mosaic_0001>

<llo_original>
// kernel: ode_func_forward.1
$region0: #{ode_func_forward.1}
  #allocation0 [shape = 'u32[]', space=smem, size = 0x4, offset = 0x4, fixed_abs, tag = 'smem constant byte address 0x4 - core index']
  #allocation1 [shape = 'u32[144,128]{1,0:T(1,128)}', space=vmem, size = 0x12000, scoped, tag = 'internal scratch']
  #allocation2 [shape = 'f32[1,1]{1,0:T(1,128)S(6)}', space=smem, size = 0x200, scoped, tag = 'scoped memory for ode_func_forward.1']
  %s0 = inlined_call_operand.<no memory space> [shape: f32[1,1], index: 0, kind: input, shape index: {}]
  %s1 = inlined_call_operand.vmem [shape: f32[8,2], index: 1, kind: input, shape index: {}]
  %s2 = inlined_call_operand.vmem [shape: f32[3,128], index: 2, kind: input, shape index: {}]
  %s3 = inlined_call_operand.vmem [shape: f32[1,128], index: 3, kind: input, shape index: {}]
  %s4 = inlined_call_operand.vmem [shape: bf16[128,128], index: 4, kind: input, shape index: {}]
  %s5 = inlined_call_operand.vmem [shape: f32[1,128], index: 5, kind: input, shape index: {}]
  %s6 = inlined_call_operand.vmem [shape: bf16[128,128], index: 6, kind: input, shape index: {}]
  %s7 = inlined_call_operand.vmem [shape: f32[1,128], index: 7, kind: input, shape index: {}]
  %s8 = inlined_call_operand.vmem [shape: bf16[128,128], index: 8, kind: input, shape index: {}]
  %s9 = inlined_call_operand.vmem [shape: f32[1,128], index: 9, kind: input, shape index: {}]
  %s10 = inlined_call_operand.vmem [shape: bf16[128,128], index: 10, kind: input, shape index: {}]
  %s11 = inlined_call_operand.vmem [shape: f32[1,128], index: 11, kind: input, shape index: {}]
  %s12 = inlined_call_operand.vmem [shape: bf16[128,128], index: 12, kind: input, shape index: {}]
  %s13 = inlined_call_operand.vmem [shape: f32[1,128], index: 13, kind: input, shape index: {}]
  %s14 = inlined_call_operand.vmem [shape: f32[8,128], index: 14, kind: input, shape index: {}]
  %s15 = inlined_call_operand.vmem [shape: f32[1,2], index: 15, kind: input, shape index: {}]
  %s16 = inlined_call_operand.vmem [shape: f32[8,2], index: 16, kind: output, shape index: {}]
  %s17 = sld [smem:[#allocation0]]
  $region74: #{ode_func_forward.1} parent=0
    _
  %s19 = ssub.s32 1, %s17
  %s20 = scalar_select 0, %s19, %s17
  %21 = sst [smem:[#allocation2]] %s0
  // Predicated region
  $region2: #{ode_func_forward.1} parent=0 // pred_check
    _
  $region3: #{ode_func_forward.1} parent=0 // pred_check_branch
    %23 = sbr.rel (0) target = $region5
  $region4: #{ode_func_forward.1} parent=0 // pred_region
    _
  $region5: #{ode_func_forward.1} parent=0 // pred_fallthru
    _
  // Predicated region
  $region6: #{ode_func_forward.1} parent=0 // pred_check
    _
  $region7: #{ode_func_forward.1} parent=0 // pred_check_branch
    %25 = sbr.rel (0) target = $region9
  $region8: #{ode_func_forward.1} parent=0 // pred_region
    _
  $region9: #{ode_func_forward.1} parent=0 // pred_fallthru
    _
  // Predicated region
  $region10: #{ode_func_forward.1} parent=0 // pred_check
    _
  $region11: #{ode_func_forward.1} parent=0 // pred_check_branch
    %27 = sbr.rel (0) target = $region13
  $region12: #{ode_func_forward.1} parent=0 // pred_region
    _
  $region13: #{ode_func_forward.1} parent=0 // pred_fallthru
    _
  // Predicated region
  $region14: #{ode_func_forward.1} parent=0 // pred_check
    _
  $region15: #{ode_func_forward.1} parent=0 // pred_check_branch
    %29 = sbr.rel (0) target = $region17
  $region16: #{ode_func_forward.1} parent=0 // pred_region
    _
  $region17: #{ode_func_forward.1} parent=0 // pred_fallthru
    _
  // Predicated region
  $region18: #{ode_func_forward.1} parent=0 // pred_check
    _
  $region19: #{ode_func_forward.1} parent=0 // pred_check_branch
    %31 = sbr.rel (0) target = $region21
  $region20: #{ode_func_forward.1} parent=0 // pred_region
    _
  $region21: #{ode_func_forward.1} parent=0 // pred_fallthru
    _
  // Predicated region
  $region22: #{ode_func_forward.1} parent=0 // pred_check
    _
  $region23: #{ode_func_forward.1} parent=0 // pred_check_branch
    %33 = sbr.rel (0) target = $region25
  $region24: #{ode_func_forward.1} parent=0 // pred_region
    _
  $region25: #{ode_func_forward.1} parent=0 // pred_fallthru
    _
  // Predicated region
  $region26: #{ode_func_forward.1} parent=0 // pred_check
    _
  $region27: #{ode_func_forward.1} parent=0 // pred_check_branch
    %35 = sbr.rel (0) target = $region29
  $region28: #{ode_func_forward.1} parent=0 // pred_region
    _
  $region29: #{ode_func_forward.1} parent=0 // pred_fallthru
    _
  // Predicated region
  $region30: #{ode_func_forward.1} parent=0 // pred_check
    _
  $region31: #{ode_func_forward.1} parent=0 // pred_check_branch
    %37 = sbr.rel (0) target = $region33
  $region32: #{ode_func_forward.1} parent=0 // pred_region
    _
  $region33: #{ode_func_forward.1} parent=0 // pred_fallthru
    _
  // Predicated region
  $region34: #{ode_func_forward.1} parent=0 // pred_check
    _
  $region35: #{ode_func_forward.1} parent=0 // pred_check_branch
    %39 = sbr.rel (0) target = $region37
  $region36: #{ode_func_forward.1} parent=0 // pred_region
    _
  $region37: #{ode_func_forward.1} parent=0 // pred_fallthru
    _
  // Predicated region
  $region38: #{ode_func_forward.1} parent=0 // pred_check
    _
  $region39: #{ode_func_forward.1} parent=0 // pred_check_branch
    %41 = sbr.rel (0) target = $region41
  $region40: #{ode_func_forward.1} parent=0 // pred_region
    _
  $region41: #{ode_func_forward.1} parent=0 // pred_fallthru
    _
  // Predicated region
  $region42: #{ode_func_forward.1} parent=0 // pred_check
    _
  $region43: #{ode_func_forward.1} parent=0 // pred_check_branch
    %43 = sbr.rel (0) target = $region45
  $region44: #{ode_func_forward.1} parent=0 // pred_region
    _
  $region45: #{ode_func_forward.1} parent=0 // pred_fallthru
    _
  // Predicated region
  $region46: #{ode_func_forward.1} parent=0 // pred_check
    _
  $region47: #{ode_func_forward.1} parent=0 // pred_check_branch
    %45 = sbr.rel (0) target = $region49
  $region48: #{ode_func_forward.1} parent=0 // pred_region
    _
  $region49: #{ode_func_forward.1} parent=0 // pred_fallthru
    _
  // Predicated region
  $region50: #{ode_func_forward.1} parent=0 // pred_check
    _
  $region51: #{ode_func_forward.1} parent=0 // pred_check_branch
    %47 = sbr.rel (0) target = $region53
  $region52: #{ode_func_forward.1} parent=0 // pred_region
    _
  $region53: #{ode_func_forward.1} parent=0 // pred_fallthru
    _
  // Predicated region
  $region54: #{ode_func_forward.1} parent=0 // pred_check
    _
  $region55: #{ode_func_forward.1} parent=0 // pred_check_branch
    %49 = sbr.rel (0) target = $region57
  $region56: #{ode_func_forward.1} parent=0 // pred_region
    _
  $region57: #{ode_func_forward.1} parent=0 // pred_fallthru
    _
  // Predicated region
  $region58: #{ode_func_forward.1} parent=0 // pred_check
    _
  $region59: #{ode_func_forward.1} parent=0 // pred_check_branch
    %51 = sbr.rel (0) target = $region61
  $region60: #{ode_func_forward.1} parent=0 // pred_region
    _
  $region61: #{ode_func_forward.1} parent=0 // pred_fallthru
    _
  // Predicated region
  $region62: #{ode_func_forward.1} parent=0 // pred_check
    _
  $region63: #{ode_func_forward.1} parent=0 // pred_check_branch
    %53 = sbr.rel (0) target = $region65
  $region64: #{ode_func_forward.1} parent=0 // pred_region
    _
  $region65: #{ode_func_forward.1} parent=0 // pred_fallthru
    _
  %s55 = sld [smem:[#allocation2]]
  %v56 = vld [vmem:[%s1] sm:$0xff]
  %v57 = vmul.f32 %v56, -2.0
  %59 = vrot.lane.b32.xlu0 %v56, 127
  %v60 = vpop.permute.xlu0 %59
  %v62 = vsub.f32 %v57, %v60
  %v63 = vsub.f32 0.0, %v56
  %v64 = vmul.f32 %v56, 2.0
  %66 = vrot.lane.b32.xlu0 %v64, 127
  %v67 = vpop.permute.xlu0 %66
  %v69 = vsub.f32 %v63, %v67
  %v70 = vld [vmem:[%s2] sm:$0x1]
  %71 = vset.pattern.permute.xlu0 0
  %72 = vperm.xlu0 %71, %v56
  %v73 = vpop.permute.xlu0 %72
  %v75 = vlaneseq
  %v76 = vshrl.u32 %v75, 7
  %v77 = vsub.s32 0, %v76
  %v78 = vrot.slane %v70, %v77
  %v79 = vmul.f32 %v73, %v78
  %v80 = vld [vmem:[%s2 + $0x1] sm:$0x1]
  %81 = vset.pattern.permute.xlu0 1
  %82 = vperm.xlu0 %81, %v56
  %v83 = vpop.permute.xlu0 %82
  %v85 = vlaneseq
  %v86 = vshrl.u32 %v85, 7
  %v87 = vsub.s32 0, %v86
  %v88 = vrot.slane %v80, %v87
  %v89 = vmul.f32 %v83, %v88
  %v90 = vadd.f32 %v79, %v89
  %v91 = vld [vmem:[%s2 + $0x2] sm:$0x1]
  %v92 = vstv %s55
  %v93 = vmul.f32 %v92, %v91
  %v94 = vlaneseq
  %v95 = vshrl.u32 %v94, 7
  %v96 = vsub.s32 0, %v95
  %v97 = vrot.slane %v93, %v96
  %v98 = vadd.f32 %v90, %v97
  %v99 = vld [vmem:[%s3] sm:$0x1]
  %v101 = vlaneseq
  %v102 = vshrl.u32 %v101, 7
  %v103 = vsub.s32 0, %v102
  %v104 = vrot.slane %v99, %v103
  %v106 = vadd.f32 %v98, %v104
  %v107 = vsub.f32 0.0, %v106
  %v108 = vmul.f32 %v107, 1.442695
  %v109 = vpow.pop %v108
  %v110 = vadd.f32 %v109, 1.0
  %v111 = vrcp.pop %v110
  %v112 = vmul.f32 %v106, %v111
  %v113 = vpack.c.bf16 %v112, %v112
  %v114 = vld [vmem:[%s4] sm:$0xf]
  %v115 = vld [vmem:[%s4 + $0x4] sm:$0xf]
  %v116 = vld [vmem:[%s4 + $0x8] sm:$0xf]
  %v117 = vld [vmem:[%s4 + $0xc] sm:$0xf]
  %v118 = vld [vmem:[%s4 + $0x10] sm:$0xf]
  %v119 = vld [vmem:[%s4 + $0x14] sm:$0xf]
  %v120 = vld [vmem:[%s4 + $0x18] sm:$0xf]
  %v121 = vld [vmem:[%s4 + $0x1c] sm:$0xf]
  %v122 = vld [vmem:[%s4 + $0x20] sm:$0xf]
  %v123 = vld [vmem:[%s4 + $0x24] sm:$0xf]
  %v124 = vld [vmem:[%s4 + $0x28] sm:$0xf]
  %v125 = vld [vmem:[%s4 + $0x2c] sm:$0xf]
  %v126 = vld [vmem:[%s4 + $0x30] sm:$0xf]
  %v127 = vld [vmem:[%s4 + $0x34] sm:$0xf]
  %v128 = vld [vmem:[%s4 + $0x38] sm:$0xf]
  %v129 = vld [vmem:[%s4 + $0x3c] sm:$0xf]
  %v130 = vld [vmem:[%s5] sm:$0x1]
  %v132 = vlaneseq
  %v133 = vshrl.u32 %v132, 7
  %v134 = vsub.s32 0, %v133
  %v135 = vrot.slane %v130, %v134
  %v153 = vunpack.c.l.b16 %v114
  %v154 = vunpack.c.l.b16 %v115
  %v155 = vunpack.c.l.b16 %v116
  %v156 = vunpack.c.l.b16 %v117
  %v157 = vunpack.c.l.b16 %v118
  %v158 = vunpack.c.l.b16 %v119
  %v159 = vunpack.c.l.b16 %v120
  %v160 = vunpack.c.l.b16 %v121
  %v161 = vunpack.c.l.b16 %v122
  %v162 = vunpack.c.l.b16 %v123
  %v163 = vunpack.c.l.b16 %v124
  %v164 = vunpack.c.l.b16 %v125
  %v165 = vunpack.c.l.b16 %v126
  %v166 = vunpack.c.l.b16 %v127
  %v167 = vunpack.c.l.b16 %v128
  %v168 = vunpack.c.l.b16 %v129
  %v169 = vpack.c.b16 %v154, %v153
  %v170 = vpack.c.b16 %v156, %v155
  %v171 = vpack.c.b16 %v158, %v157
  %v172 = vpack.c.b16 %v160, %v159
  %v173 = vpack.c.b16 %v162, %v161
  %v174 = vpack.c.b16 %v164, %v163
  %v175 = vpack.c.b16 %v166, %v165
  %v176 = vpack.c.b16 %v168, %v167
  %185 = vmatprep.subr.bf16.mxu0 0
  %186 = vmatpush1.bf16.msra.mxu0 %v169
  %187 = vmatprep.subr.bf16.mxu0 0
  %188 = vmatpush1.bf16.msra.mxu0 %v170
  %189 = vmatprep.subr.bf16.mxu0 0
  %190 = vmatpush1.bf16.msra.mxu0 %v171
  %191 = vmatprep.subr.bf16.mxu0 0
  %192 = vmatpush1.bf16.msra.mxu0 %v172
  %193 = vmatprep.subr.bf16.mxu0 0
  %194 = vmatpush1.bf16.msra.mxu0 %v173
  %195 = vmatprep.subr.bf16.mxu0 0
  %196 = vmatpush1.bf16.msra.mxu0 %v174
  %197 = vmatprep.subr.bf16.mxu0 0
  %198 = vmatpush1.bf16.msra.mxu0 %v175
  %199 = vmatprep.subr.bf16.mxu0 0
  %200 = vmatpush1.bf16.msra.mxu0 %v176
  %201 = vmatprep.subr.bf16.mxu0 0
  %202 = vmatpush1.bf16.msra.mxu0 0
  %203 = vmatprep.subr.bf16.mxu0 0
  %204 = vmatpush1.bf16.msra.mxu0 0
  %205 = vmatprep.subr.bf16.mxu0 0
  %206 = vmatpush1.bf16.msra.mxu0 0
  %207 = vmatprep.subr.bf16.mxu0 0
  %208 = vmatpush1.bf16.msra.mxu0 0
  %209 = vmatprep.subr.bf16.mxu0 0
  %210 = vmatpush1.bf16.msra.mxu0 0
  %211 = vmatprep.subr.bf16.mxu0 0
  %212 = vmatpush1.bf16.msra.mxu0 0
  %213 = vmatprep.subr.bf16.mxu0 0
  %214 = vmatpush1.bf16.msra.mxu0 0
  %215 = vmatprep.subr.bf16.mxu0 0
  %216 = vmatpush1.bf16.msra.mxu0 0
  %217 = vmatprep.mubr.bf16.mxu0 0
  %218 = vmatmul.mubr.bf16.gmra.mrb[0].mxu0 %v113
  %v219 = vpop.f32.mrb[0].mxu0
  %v220 = vadd.f32 %v135, %v219
  %v221 = vpop.f32.mrb[0].mxu0
  %v222 = vpop.f32.mrb[0].mxu0
  %v223 = vpop.f32.mrb[0].mxu0
  %224 = vdwg.mxu0
  %v225 = vsub.f32 0.0, %v220
  %v226 = vmul.f32 %v225, 1.442695
  %v227 = vpow.pop %v226
  %v228 = vadd.f32 %v227, 1.0
  %v229 = vrcp.pop %v228
  %v230 = vmul.f32 %v220, %v229
  %v231 = vpack.c.bf16 %v230, %v230
  %v232 = vld [vmem:[%s6] sm:$0xf]
  %v233 = vld [vmem:[%s6 + $0x4] sm:$0xf]
  %v234 = vld [vmem:[%s6 + $0x8] sm:$0xf]
  %v235 = vld [vmem:[%s6 + $0xc] sm:$0xf]
  %v236 = vld [vmem:[%s6 + $0x10] sm:$0xf]
  %v237 = vld [vmem:[%s6 + $0x14] sm:$0xf]
  %v238 = vld [vmem:[%s6 + $0x18] sm:$0xf]
  %v239 = vld [vmem:[%s6 + $0x1c] sm:$0xf]
  %v240 = vld [vmem:[%s6 + $0x20] sm:$0xf]
  %v241 = vld [vmem:[%s6 + $0x24] sm:$0xf]
  %v242 = vld [vmem:[%s6 + $0x28] sm:$0xf]
  %v243 = vld [vmem:[%s6 + $0x2c] sm:$0xf]
  %v244 = vld [vmem:[%s6 + $0x30] sm:$0xf]
  %v245 = vld [vmem:[%s6 + $0x34] sm:$0xf]
  %v246 = vld [vmem:[%s6 + $0x38] sm:$0xf]
  %v247 = vld [vmem:[%s6 + $0x3c] sm:$0xf]
  %v248 = vld [vmem:[%s7] sm:$0x1]
  %v250 = vlaneseq
  %v251 = vshrl.u32 %v250, 7
  %v252 = vsub.s32 0, %v251
  %v253 = vrot.slane %v248, %v252
  %v271 = vunpack.c.l.b16 %v232
  %v272 = vunpack.c.l.b16 %v233
  %v273 = vunpack.c.l.b16 %v234
  %v274 = vunpack.c.l.b16 %v235
  %v275 = vunpack.c.l.b16 %v236
  %v276 = vunpack.c.l.b16 %v237
  %v277 = vunpack.c.l.b16 %v238
  %v278 = vunpack.c.l.b16 %v239
  %v279 = vunpack.c.l.b16 %v240
  %v280 = vunpack.c.l.b16 %v241
  %v281 = vunpack.c.l.b16 %v242
  %v282 = vunpack.c.l.b16 %v243
  %v283 = vunpack.c.l.b16 %v244
  %v284 = vunpack.c.l.b16 %v245
  %v285 = vunpack.c.l.b16 %v246
  %v286 = vunpack.c.l.b16 %v247
  %v287 = vpack.c.b16 %v272, %v271
  %v288 = vpack.c.b16 %v274, %v273
  %v289 = vpack.c.b16 %v276, %v275
  %v290 = vpack.c.b16 %v278, %v277
  %v291 = vpack.c.b16 %v280, %v279
  %v292 = vpack.c.b16 %v282, %v281
  %v293 = vpack.c.b16 %v284, %v283
  %v294 = vpack.c.b16 %v286, %v285
  %303 = vmatprep.subr.bf16.mxu0 0
  %304 = vmatpush1.bf16.msra.mxu0 %v287
  %305 = vmatprep.subr.bf16.mxu0 0
  %306 = vmatpush1.bf16.msra.mxu0 %v288
  %307 = vmatprep.subr.bf16.mxu0 0
  %308 = vmatpush1.bf16.msra.mxu0 %v289
  %309 = vmatprep.subr.bf16.mxu0 0
  %310 = vmatpush1.bf16.msra.mxu0 %v290
  %311 = vmatprep.subr.bf16.mxu0 0
  %312 = vmatpush1.bf16.msra.mxu0 %v291
  %313 = vmatprep.subr.bf16.mxu0 0
  %314 = vmatpush1.bf16.msra.mxu0 %v292
  %315 = vmatprep.subr.bf16.mxu0 0
  %316 = vmatpush1.bf16.msra.mxu0 %v293
  %317 = vmatprep.subr.bf16.mxu0 0
  %318 = vmatpush1.bf16.msra.mxu0 %v294
  %319 = vmatprep.subr.bf16.mxu0 0
  %320 = vmatpush1.bf16.msra.mxu0 0
  %321 = vmatprep.subr.bf16.mxu0 0
  %322 = vmatpush1.bf16.msra.mxu0 0
  %323 = vmatprep.subr.bf16.mxu0 0
  %324 = vmatpush1.bf16.msra.mxu0 0
  %325 = vmatprep.subr.bf16.mxu0 0
  %326 = vmatpush1.bf16.msra.mxu0 0
  %327 = vmatprep.subr.bf16.mxu0 0
  %328 = vmatpush1.bf16.msra.mxu0 0
  %329 = vmatprep.subr.bf16.mxu0 0
  %330 = vmatpush1.bf16.msra.mxu0 0
  %331 = vmatprep.subr.bf16.mxu0 0
  %332 = vmatpush1.bf16.msra.mxu0 0
  %333 = vmatprep.subr.bf16.mxu0 0
  %334 = vmatpush1.bf16.msra.mxu0 0
  %335 = vmatprep.mubr.bf16.mxu0 0
  %336 = vmatmul.mubr.bf16.gmra.mrb[0].mxu0 %v231
  %v337 = vpop.f32.mrb[0].mxu0
  %v338 = vadd.f32 %v253, %v337
  %v339 = vpop.f32.mrb[0].mxu0
  %v340 = vpop.f32.mrb[0].mxu0
  %v341 = vpop.f32.mrb[0].mxu0
  %342 = vdwg.mxu0
  %v343 = vsub.f32 0.0, %v338
  %v344 = vmul.f32 %v343, 1.442695
  %v345 = vpow.pop %v344
  %v346 = vadd.f32 %v345, 1.0
  %v347 = vrcp.pop %v346
  %v348 = vmul.f32 %v338, %v347
  %v349 = vpack.c.bf16 %v348, %v348
  %v350 = vld [vmem:[%s8] sm:$0xf]
  %v351 = vld [vmem:[%s8 + $0x4] sm:$0xf]
  %v352 = vld [vmem:[%s8 + $0x8] sm:$0xf]
  %v353 = vld [vmem:[%s8 + $0xc] sm:$0xf]
  %v354 = vld [vmem:[%s8 + $0x10] sm:$0xf]
  %v355 = vld [vmem:[%s8 + $0x14] sm:$0xf]
  %v356 = vld [vmem:[%s8 + $0x18] sm:$0xf]
  %v357 = vld [vmem:[%s8 + $0x1c] sm:$0xf]
  %v358 = vld [vmem:[%s8 + $0x20] sm:$0xf]
  %v359 = vld [vmem:[%s8 + $0x24] sm:$0xf]
  %v360 = vld [vmem:[%s8 + $0x28] sm:$0xf]
  %v361 = vld [vmem:[%s8 + $0x2c] sm:$0xf]
  %v362 = vld [vmem:[%s8 + $0x30] sm:$0xf]
  %v363 = vld [vmem:[%s8 + $0x34] sm:$0xf]
  %v364 = vld [vmem:[%s8 + $0x38] sm:$0xf]
  %v365 = vld [vmem:[%s8 + $0x3c] sm:$0xf]
  %v366 = vld [vmem:[%s9] sm:$0x1]
  %v368 = vlaneseq
  %v369 = vshrl.u32 %v368, 7
  %v370 = vsub.s32 0, %v369
  %v371 = vrot.slane %v366, %v370
  %v389 = vunpack.c.l.b16 %v350
  %v390 = vunpack.c.l.b16 %v351
  %v391 = vunpack.c.l.b16 %v352
  %v392 = vunpack.c.l.b16 %v353
  %v393 = vunpack.c.l.b16 %v354
  %v394 = vunpack.c.l.b16 %v355
  %v395 = vunpack.c.l.b16 %v356
  %v396 = vunpack.c.l.b16 %v357
  %v397 = vunpack.c.l.b16 %v358
  %v398 = vunpack.c.l.b16 %v359
  %v399 = vunpack.c.l.b16 %v360
  %v400 = vunpack.c.l.b16 %v361
  %v401 = vunpack.c.l.b16 %v362
  %v402 = vunpack.c.l.b16 %v363
  %v403 = vunpack.c.l.b16 %v364
  %v404 = vunpack.c.l.b16 %v365
  %v405 = vpack.c.b16 %v390, %v389
  %v406 = vpack.c.b16 %v392, %v391
  %v407 = vpack.c.b16 %v394, %v393
  %v408 = vpack.c.b16 %v396, %v395
  %v409 = vpack.c.b16 %v398, %v397
  %v410 = vpack.c.b16 %v400, %v399
  %v411 = vpack.c.b16 %v402, %v401
  %v412 = vpack.c.b16 %v404, %v403
  %421 = vmatprep.subr.bf16.mxu0 0
  %422 = vmatpush1.bf16.msra.mxu0 %v405
  %423 = vmatprep.subr.bf16.mxu0 0
  %424 = vmatpush1.bf16.msra.mxu0 %v406
  %425 = vmatprep.subr.bf16.mxu0 0
  %426 = vmatpush1.bf16.msra.mxu0 %v407
  %427 = vmatprep.subr.bf16.mxu0 0
  %428 = vmatpush1.bf16.msra.mxu0 %v408
  %429 = vmatprep.subr.bf16.mxu0 0
  %430 = vmatpush1.bf16.msra.mxu0 %v409
  %431 = vmatprep.subr.bf16.mxu0 0
  %432 = vmatpush1.bf16.msra.mxu0 %v410
  %433 = vmatprep.subr.bf16.mxu0 0
  %434 = vmatpush1.bf16.msra.mxu0 %v411
  %435 = vmatprep.subr.bf16.mxu0 0
  %436 = vmatpush1.bf16.msra.mxu0 %v412
  %437 = vmatprep.subr.bf16.mxu0 0
  %438 = vmatpush1.bf16.msra.mxu0 0
  %439 = vmatprep.subr.bf16.mxu0 0
  %440 = vmatpush1.bf16.msra.mxu0 0
  %441 = vmatprep.subr.bf16.mxu0 0
  %442 = vmatpush1.bf16.msra.mxu0 0
  %443 = vmatprep.subr.bf16.mxu0 0
  %444 = vmatpush1.bf16.msra.mxu0 0
  %445 = vmatprep.subr.bf16.mxu0 0
  %446 = vmatpush1.bf16.msra.mxu0 0
  %447 = vmatprep.subr.bf16.mxu0 0
  %448 = vmatpush1.bf16.msra.mxu0 0
  %449 = vmatprep.subr.bf16.mxu0 0
  %450 = vmatpush1.bf16.msra.mxu0 0
  %451 = vmatprep.subr.bf16.mxu0 0
  %452 = vmatpush1.bf16.msra.mxu0 0
  %453 = vmatprep.mubr.bf16.mxu0 0
  %454 = vmatmul.mubr.bf16.gmra.mrb[0].mxu0 %v349
  %v455 = vpop.f32.mrb[0].mxu0
  %v456 = vadd.f32 %v371, %v455
  %v457 = vpop.f32.mrb[0].mxu0
  %v458 = vpop.f32.mrb[0].mxu0
  %v459 = vpop.f32.mrb[0].mxu0
  %460 = vdwg.mxu0
  %v461 = vsub.f32 0.0, %v456
  %v462 = vmul.f32 %v461, 1.442695
  %v463 = vpow.pop %v462
  %v464 = vadd.f32 %v463, 1.0
  %v465 = vrcp.pop %v464
  %v466 = vmul.f32 %v456, %v465
  %v467 = vpack.c.bf16 %v466, %v466
  %v468 = vld [vmem:[%s10] sm:$0xf]
  %v469 = vld [vmem:[%s10 + $0x4] sm:$0xf]
  %v470 = vld [vmem:[%s10 + $0x8] sm:$0xf]
  %v471 = vld [vmem:[%s10 + $0xc] sm:$0xf]
  %v472 = vld [vmem:[%s10 + $0x10] sm:$0xf]
  %v473 = vld [vmem:[%s10 + $0x14] sm:$0xf]
  %v474 = vld [vmem:[%s10 + $0x18] sm:$0xf]
  %v475 = vld [vmem:[%s10 + $0x1c] sm:$0xf]
  %v476 = vld [vmem:[%s10 + $0x20] sm:$0xf]
  %v477 = vld [vmem:[%s10 + $0x24] sm:$0xf]
  %v478 = vld [vmem:[%s10 + $0x28] sm:$0xf]
  %v479 = vld [vmem:[%s10 + $0x2c] sm:$0xf]
  %v480 = vld [vmem:[%s10 + $0x30] sm:$0xf]
  %v481 = vld [vmem:[%s10 + $0x34] sm:$0xf]
  %v482 = vld [vmem:[%s10 + $0x38] sm:$0xf]
  %v483 = vld [vmem:[%s10 + $0x3c] sm:$0xf]
  %v484 = vld [vmem:[%s11] sm:$0x1]
  %v486 = vlaneseq
  %v487 = vshrl.u32 %v486, 7
  %v488 = vsub.s32 0, %v487
  %v489 = vrot.slane %v484, %v488
  %v507 = vunpack.c.l.b16 %v468
  %v508 = vunpack.c.l.b16 %v469
  %v509 = vunpack.c.l.b16 %v470
  %v510 = vunpack.c.l.b16 %v471
  %v511 = vunpack.c.l.b16 %v472
  %v512 = vunpack.c.l.b16 %v473
  %v513 = vunpack.c.l.b16 %v474
  %v514 = vunpack.c.l.b16 %v475
  %v515 = vunpack.c.l.b16 %v476
  %v516 = vunpack.c.l.b16 %v477
  %v517 = vunpack.c.l.b16 %v478
  %v518 = vunpack.c.l.b16 %v479
  %v519 = vunpack.c.l.b16 %v480
  %v520 = vunpack.c.l.b16 %v481
  %v521 = vunpack.c.l.b16 %v482
  %v522 = vunpack.c.l.b16 %v483
  %v523 = vpack.c.b16 %v508, %v507
  %v524 = vpack.c.b16 %v510, %v509
  %v525 = vpack.c.b16 %v512, %v511
  %v526 = vpack.c.b16 %v514, %v513
  %v527 = vpack.c.b16 %v516, %v515
  %v528 = vpack.c.b16 %v518, %v517
  %v529 = vpack.c.b16 %v520, %v519
  %v530 = vpack.c.b16 %v522, %v521
  %539 = vmatprep.subr.bf16.mxu0 0
  %540 = vmatpush1.bf16.msra.mxu0 %v523
  %541 = vmatprep.subr.bf16.mxu0 0
  %542 = vmatpush1.bf16.msra.mxu0 %v524
  %543 = vmatprep.subr.bf16.mxu0 0
  %544 = vmatpush1.bf16.msra.mxu0 %v525
  %545 = vmatprep.subr.bf16.mxu0 0
  %546 = vmatpush1.bf16.msra.mxu0 %v526
  %547 = vmatprep.subr.bf16.mxu0 0
  %548 = vmatpush1.bf16.msra.mxu0 %v527
  %549 = vmatprep.subr.bf16.mxu0 0
  %550 = vmatpush1.bf16.msra.mxu0 %v528
  %551 = vmatprep.subr.bf16.mxu0 0
  %552 = vmatpush1.bf16.msra.mxu0 %v529
  %553 = vmatprep.subr.bf16.mxu0 0
  %554 = vmatpush1.bf16.msra.mxu0 %v530
  %555 = vmatprep.subr.bf16.mxu0 0
  %556 = vmatpush1.bf16.msra.mxu0 0
  %557 = vmatprep.subr.bf16.mxu0 0
  %558 = vmatpush1.bf16.msra.mxu0 0
  %559 = vmatprep.subr.bf16.mxu0 0
  %560 = vmatpush1.bf16.msra.mxu0 0
  %561 = vmatprep.subr.bf16.mxu0 0
  %562 = vmatpush1.bf16.msra.mxu0 0
  %563 = vmatprep.subr.bf16.mxu0 0
  %564 = vmatpush1.bf16.msra.mxu0 0
  %565 = vmatprep.subr.bf16.mxu0 0
  %566 = vmatpush1.bf16.msra.mxu0 0
  %567 = vmatprep.subr.bf16.mxu0 0
  %568 = vmatpush1.bf16.msra.mxu0 0
  %569 = vmatprep.subr.bf16.mxu0 0
  %570 = vmatpush1.bf16.msra.mxu0 0
  %571 = vmatprep.mubr.bf16.mxu0 0
  %572 = vmatmul.mubr.bf16.gmra.mrb[0].mxu0 %v467
  %v573 = vpop.f32.mrb[0].mxu0
  %v574 = vadd.f32 %v489, %v573
  %v575 = vpop.f32.mrb[0].mxu0
  %v576 = vpop.f32.mrb[0].mxu0
  %v577 = vpop.f32.mrb[0].mxu0
  %578 = vdwg.mxu0
  %v579 = vsub.f32 0.0, %v574
  %v580 = vmul.f32 %v579, 1.442695
  %v581 = vpow.pop %v580
  %v582 = vadd.f32 %v581, 1.0
  %v583 = vrcp.pop %v582
  %v584 = vmul.f32 %v574, %v583
  %v585 = vpack.c.bf16 %v584, %v584
  %v586 = vld [vmem:[%s12] sm:$0xf]
  %v587 = vld [vmem:[%s12 + $0x4] sm:$0xf]
  %v588 = vld [vmem:[%s12 + $0x8] sm:$0xf]
  %v589 = vld [vmem:[%s12 + $0xc] sm:$0xf]
  %v590 = vld [vmem:[%s12 + $0x10] sm:$0xf]
  %v591 = vld [vmem:[%s12 + $0x14] sm:$0xf]
  %v592 = vld [vmem:[%s12 + $0x18] sm:$0xf]
  %v593 = vld [vmem:[%s12 + $0x1c] sm:$0xf]
  %v594 = vld [vmem:[%s12 + $0x20] sm:$0xf]
  %v595 = vld [vmem:[%s12 + $0x24] sm:$0xf]
  %v596 = vld [vmem:[%s12 + $0x28] sm:$0xf]
  %v597 = vld [vmem:[%s12 + $0x2c] sm:$0xf]
  %v598 = vld [vmem:[%s12 + $0x30] sm:$0xf]
  %v599 = vld [vmem:[%s12 + $0x34] sm:$0xf]
  %v600 = vld [vmem:[%s12 + $0x38] sm:$0xf]
  %v601 = vld [vmem:[%s12 + $0x3c] sm:$0xf]
  %v602 = vld [vmem:[%s13] sm:$0x1]
  %v604 = vlaneseq
  %v605 = vshrl.u32 %v604, 7
  %v606 = vsub.s32 0, %v605
  %v607 = vrot.slane %v602, %v606
  %v625 = vunpack.c.l.b16 %v586
  %v626 = vunpack.c.l.b16 %v587
  %v627 = vunpack.c.l.b16 %v588
  %v628 = vunpack.c.l.b16 %v589
  %v629 = vunpack.c.l.b16 %v590
  %v630 = vunpack.c.l.b16 %v591
  %v631 = vunpack.c.l.b16 %v592
  %v632 = vunpack.c.l.b16 %v593
  %v633 = vunpack.c.l.b16 %v594
  %v634 = vunpack.c.l.b16 %v595
  %v635 = vunpack.c.l.b16 %v596
  %v636 = vunpack.c.l.b16 %v597
  %v637 = vunpack.c.l.b16 %v598
  %v638 = vunpack.c.l.b16 %v599
  %v639 = vunpack.c.l.b16 %v600
  %v640 = vunpack.c.l.b16 %v601
  %v641 = vpack.c.b16 %v626, %v625
  %v642 = vpack.c.b16 %v628, %v627
  %v643 = vpack.c.b16 %v630, %v629
  %v644 = vpack.c.b16 %v632, %v631
  %v645 = vpack.c.b16 %v634, %v633
  %v646 = vpack.c.b16 %v636, %v635
  %v647 = vpack.c.b16 %v638, %v637
  %v648 = vpack.c.b16 %v640, %v639
  %657 = vmatprep.subr.bf16.mxu0 0
  %658 = vmatpush1.bf16.msra.mxu0 %v641
  %659 = vmatprep.subr.bf16.mxu0 0
  %660 = vmatpush1.bf16.msra.mxu0 %v642
  %661 = vmatprep.subr.bf16.mxu0 0
  %662 = vmatpush1.bf16.msra.mxu0 %v643
  %663 = vmatprep.subr.bf16.mxu0 0
  %664 = vmatpush1.bf16.msra.mxu0 %v644
  %665 = vmatprep.subr.bf16.mxu0 0
  %666 = vmatpush1.bf16.msra.mxu0 %v645
  %667 = vmatprep.subr.bf16.mxu0 0
  %668 = vmatpush1.bf16.msra.mxu0 %v646
  %669 = vmatprep.subr.bf16.mxu0 0
  %670 = vmatpush1.bf16.msra.mxu0 %v647
  %671 = vmatprep.subr.bf16.mxu0 0
  %672 = vmatpush1.bf16.msra.mxu0 %v648
  %673 = vmatprep.subr.bf16.mxu0 0
  %674 = vmatpush1.bf16.msra.mxu0 0
  %675 = vmatprep.subr.bf16.mxu0 0
  %676 = vmatpush1.bf16.msra.mxu0 0
  %677 = vmatprep.subr.bf16.mxu0 0
  %678 = vmatpush1.bf16.msra.mxu0 0
  %679 = vmatprep.subr.bf16.mxu0 0
  %680 = vmatpush1.bf16.msra.mxu0 0
  %681 = vmatprep.subr.bf16.mxu0 0
  %682 = vmatpush1.bf16.msra.mxu0 0
  %683 = vmatprep.subr.bf16.mxu0 0
  %684 = vmatpush1.bf16.msra.mxu0 0
  %685 = vmatprep.subr.bf16.mxu0 0
  %686 = vmatpush1.bf16.msra.mxu0 0
  %687 = vmatprep.subr.bf16.mxu0 0
  %688 = vmatpush1.bf16.msra.mxu0 0
  %689 = vmatprep.mubr.bf16.mxu0 0
  %690 = vmatmul.mubr.bf16.gmra.mrb[0].mxu0 %v585
  %v691 = vpop.f32.mrb[0].mxu0
  %v692 = vadd.f32 %v607, %v691
  %v693 = vpop.f32.mrb[0].mxu0
  %v694 = vpop.f32.mrb[0].mxu0
  %v695 = vpop.f32.mrb[0].mxu0
  %696 = vdwg.mxu0
  %v697 = vsub.f32 0.0, %v692
  %v698 = vmul.f32 %v697, 1.442695
  %v699 = vpow.pop %v698
  %v700 = vadd.f32 %v699, 1.0
  %v701 = vrcp.pop %v700
  %v702 = vmul.f32 %v692, %v701
  %v703 = vld [vmem:[%s14] sm:$0x1]
  %v704 = vlaneseq
  %v705 = vshrl.u32 %v704, 7
  %v706 = vsub.s32 0, %v705
  %v707 = vrot.slane %v703, %v706
  %v708 = vmul.f32 %v702, %v707
  %709 = vadd.xlane.f32.xlu0 %v708
  %v710 = vpop.xlane.xlu0 %709
  %v711 = vld [vmem:[%s14 + $0x1] sm:$0x1]
  %v712 = vlaneseq
  %v713 = vshrl.u32 %v712, 7
  %v714 = vsub.s32 0, %v713
  %v715 = vrot.slane %v711, %v714
  %v716 = vmul.f32 %v702, %v715
  %717 = vadd.xlane.f32.xlu0 %v716
  %v718 = vpop.xlane.xlu0 %717
  %v719 = vlaneseq
  %v720 = vand.u32 %v719, 127
  %vm721 = vcmp.eq.s32.totalorder %v720, 0
  %v722 = vadd.f32 %v62, %v710
  %v723 = vadd.f32 %v69, %v718
  %725 = vset.pattern.permute.xlu0 0
  %726 = vperm.xlu0 %725, %v722
  %v727 = vpop.permute.xlu0 %726
  %730 = vset.pattern.permute.xlu0 0
  %731 = vperm.xlu0 %730, %v723
  %v732 = vpop.permute.xlu0 %731
  %v734 = vsel %vm721, %v727, %v732
  %v735 = vld [vmem:[%s15] sm:$0x1]
  %v737 = vlaneseq
  %v738 = vshrl.u32 %v737, 7
  %v739 = vsub.s32 0, %v738
  %v740 = vrot.slane %v735, %v739
  %v742 = vadd.f32 %v734, %v740
  %vm743 = vcmask 15360
  %744 = vst.msk [vmem:[%s16] sm:$0xff] %vm743, %v742
  // Predicated region
  $region66: #{ode_func_forward.1} parent=0 // pred_check
    _
  $region67: #{ode_func_forward.1} parent=0 // pred_check_branch
    %746 = sbr.rel (0) target = $region69
  $region68: #{ode_func_forward.1} parent=0 // pred_region
    _
  $region69: #{ode_func_forward.1} parent=0 // pred_fallthru
    _
  // Predicated region
  $region70: #{ode_func_forward.1} parent=0 // pred_check
    _
  $region71: #{ode_func_forward.1} parent=0 // pred_check_branch
    %748 = sbr.rel (0) target = $region73
  $region72: #{ode_func_forward.1} parent=0 // pred_region
    _
  $region73: #{ode_func_forward.1} parent=0 // pred_fallthru
    _

</llo_original>
